<compile_context>
chip_gen: v6e
topology: v6e:2x2x1
jax: 0.10.0
libtpu: 0.0.40
codegen_flags: <defaults>
</compile_context>

<pallas_src>
import functools

import jax
import jax.numpy as jnp
from jax.experimental import pallas as pl
from jax.experimental.pallas import tpu as pltpu

ALPHA = 0.5            # matches module default
REDUCTION = "mean"     # matches module default
COS_EPS = 1e-8         # torch F.cosine_similarity eps


def _dti_loss_kernel(pred_ref, score_ref, out_ref, acc_ref, *,
                     batch, tile_rows, tiles_per_shard, needs_mask):
    i = pl.program_id(1)            # tile index within this shard (reduction axis)

    @pl.when(i == 0)
    def _init():
        acc_ref[0] = jnp.float32(0.0)   # running sum of per-row cosine losses
        acc_ref[1] = jnp.float32(0.0)   # running sum of squared errors (MSE 'sum')

    pred = pred_ref[...].astype(jnp.float32)      # (TB, D)
    score = score_ref[...].astype(jnp.float32)    # (TB, D)

    # Mask padded rows of ragged / fully-OOB tiles (static Python check, so the
    # whole path is compiled out when the batch tiles evenly).
    if needs_mask:
        row0 = (pl.program_id(0) * tiles_per_shard + i) * tile_rows
        rows = jax.lax.broadcasted_iota(jnp.int32, (pred.shape[0], 1), 0) + row0
        valid = rows < batch                       # (TB, 1) bool, broadcasts on lanes
        # Zero the inputs (not just reduced rows) so garbage/NaN in OOB rows can
        # never reach the accumulators via any intermediate.
        pred = jnp.where(valid, pred, 0.0)
        score = jnp.where(valid, score, 0.0)

    # --- per-row reductions (shared by cosine sim and SSE) ---
    dot = jnp.sum(pred * score, axis=-1, keepdims=True)       # (TB, 1)
    np2 = jnp.sum(pred * pred, axis=-1, keepdims=True)        # |p|^2
    ns2 = jnp.sum(score * score, axis=-1, keepdims=True)      # |s|^2

    # cosine similarity along dim=-1 (per row), torch clamp_min(w1*w2, eps^2)
    cos = dot * jax.lax.rsqrt(jnp.maximum(np2 * ns2, COS_EPS * COS_EPS))
    cos_loss = 1.0 - cos                                       # (TB, 1)
    # SSE via the norm identity: ||p - s||^2 = |p|^2 + |s|^2 - 2<p,s>
    sse_rows = np2 + ns2 - 2.0 * dot                           # (TB, 1)
    if needs_mask:
        cos_loss = jnp.where(valid, cos_loss, 0.0)
        # sse_rows is already 0 on masked rows (inputs were zeroed).

    # NOTE: scalar sequential accumulation across tiles; within a tile the sum
    # is a tree reduce.  Good enough for f32; switch to Kahan if bit-closeness
    # to XLA's tree reduction matters at very large B*D.
    acc_ref[0] += jnp.sum(cos_loss)
    acc_ref[1] += jnp.sum(sse_rows)

    @pl.when(i == pl.num_programs(1) - 1)
    def _finalize():
        out_ref[0, 0] = acc_ref[0]
        out_ref[0, 1] = acc_ref[1]


def _default_vmem_limit():
    """~5/8 of physical VMEM, capped at 64 MiB: 64 MiB on v5e/v6e (128 MiB
    physical), ~40 MiB on v7x (64 MiB per-TC), leaving pipeline headroom."""
    cap = 64 << 20   # conservative fallback = smallest generation (v7x per-TC)
    try:
        info_cap = int(pltpu.get_tpu_info().vmem_capacity_bytes)
        if info_cap > 0:
            cap = info_cap
    except Exception:
        pass
    return int(min(cap * 5 // 8, 64 << 20))


def _pick_tile_rows(batch, feat, itemsize, vmem_limit):
    # Per-input block budget.  Footprint ~= 2 inputs x 2 pipeline buffers x block
    # + ~2 f32 upcast working copies; keep that inside ~3/4 of the VMEM limit.
    f32_blowup = max(1, 4 // max(1, itemsize))
    denom = 4 + 2 * f32_blowup
    budget = min(8 << 20, (vmem_limit * 3 // 4) // denom)   # 4-8 MiB typical
    tb = max(8, budget // max(1, feat * itemsize))
    if tb >= batch:
        return batch                      # single full-array block
    tb = max(8, (tb // 8) * 8)            # sublane-aligned tile
    # Prefer the largest multiple-of-8 divisor of B within budget so the ragged
    # mask is statically compiled out.
    best = 0
    d = 1
    while d * d <= batch:
        if batch % d == 0:
            for cand in (d, batch // d):
                if cand % 8 == 0 and cand <= tb and cand > best:
                    best = cand
        d += 1
    return best if best >= 8 else tb


def drug_target_interaction_loss(pred, interaction_score, *, alpha=ALPHA,
                                 reduction=REDUCTION, tile_rows=None,
                                 num_shards=None):
    """pred, interaction_score: (batch, feature_dim). Returns scalar f32.

    The kernel is HBM-bandwidth bound: keeping the HBM-resident inputs in bf16
    halves wall-clock on all generations; accumulation is always f32 in VMEM.
    """
    assert pred.shape == interaction_score.shape
    B, D = pred.shape
    if reduction not in ("mean", "sum"):
        # TODO(synk): reduction='none' returns a (B,) vector; this scalar-output
        # kernel implements only the 'mean' / 'sum' paths.
        raise NotImplementedError("reduction='none' not supported by this kernel")

    vmem_limit = _default_vmem_limit()
    itemsize = jnp.dtype(pred.dtype).itemsize
    if tile_rows is None:
        tile_rows = _pick_tile_rows(B, D, itemsize, vmem_limit)
    tile_rows = int(min(tile_rows, B))

    nblocks = pl.cdiv(B, tile_rows)
    if num_shards is None:
        num_shards = 2 if nblocks >= 2 else 1      # feeds both TCs on v7x; free on 1-TC chips
    num_shards = int(max(1, min(num_shards, nblocks)))
    tiles_per_shard = pl.cdiv(nblocks, num_shards)
    needs_mask = (num_shards * tiles_per_shard * tile_rows) != B

    if needs_mask:
        # Clamp so padded (fully OOB) tiles re-read the last real block; their
        # rows are masked out by global row index inside the kernel.
        def in_map(j, i):
            return (jnp.minimum(j * tiles_per_shard + i, nblocks - 1), 0)
    else:
        def in_map(j, i):
            return (j * tiles_per_shard + i, 0)

    kernel = functools.partial(
        _dti_loss_kernel, batch=B, tile_rows=tile_rows,
        tiles_per_shard=tiles_per_shard, needs_mask=needs_mask)

    partials = pl.pallas_call(
        kernel,
        out_shape=jax.ShapeDtypeStruct((num_shards, 2), jnp.float32),
        grid_spec=pltpu.PrefetchScalarGridSpec(
            num_scalar_prefetch=0,
            grid=(num_shards, tiles_per_shard),
            in_specs=[
                pl.BlockSpec((tile_rows, D), in_map),
                pl.BlockSpec((tile_rows, D), in_map),
            ],
            # Per-shard (cos_sum, sse) partials through SMEM (no masked VMEM vst).
            out_specs=pl.BlockSpec((1, 2), lambda j, i: (j, 0),
                                   memory_space=pltpu.SMEM),
            scratch_shapes=[pltpu.SMEM((2,), jnp.float32)],
        ),
        compiler_params=pltpu.CompilerParams(
            # Shard axis feeds both TensorCores on v7x; tile axis is the
            # sequential accumulator (reduction) axis.
            dimension_semantics=("parallel", "arbitrary"),
            vmem_limit_bytes=vmem_limit,
        ),
    )(pred, interaction_score)

    cos_sum = jnp.sum(partials[:, 0])
    sse = jnp.sum(partials[:, 1])
    # total_loss_i = alpha*cos_loss_i + (1-alpha)*sse  (scalar sse broadcast
    # over batch rows, as in the PyTorch module) -- combined on scalars:
    if reduction == "mean":
        return (alpha * (cos_sum / B) + (1.0 - alpha) * sse).astype(jnp.float32)
    return (alpha * cos_sum + (1.0 - alpha) * (B * sse)).astype(jnp.float32)


def _reference(pred, score, alpha=ALPHA, reduction=REDUCTION):
    pred = pred.astype(jnp.float32)
    score = score.astype(jnp.float32)
    dot = jnp.sum(pred * score, axis=-1)
    denom = jnp.maximum(jnp.sum(pred * pred, axis=-1) *
                        jnp.sum(score * score, axis=-1), COS_EPS * COS_EPS)
    cos = dot / jnp.sqrt(denom)
    cosine_loss = 1.0 - cos
    sse = jnp.sum((pred - score) ** 2)
    total = alpha * cosine_loss + (1.0 - alpha) * sse
    return jnp.mean(total) if reduction == "mean" else jnp.sum(total)


if __name__ == "__main__":
    key = jax.random.PRNGKey(0)
    k1, k2, k3, k4 = jax.random.split(key, 4)
    B, D = 16, 32
    pred = jax.random.normal(k1, (B, D), dtype=jnp.float32)
    interaction_score = jax.random.normal(k2, (B, D), dtype=jnp.float32)

    # Default path (auto tile -> single full block at this toy size).
    ref = _reference(pred, interaction_score)
    loss = drug_target_interaction_loss(pred, interaction_score)
    jax.block_until_ready(loss)
    assert jnp.allclose(loss, ref, rtol=1e-5, atol=1e-4), (loss, ref)

    # Forced multi-tile + 2-shard path (grid=(2,1)): per-shard accumulators,
    # 'parallel' shard axis, partial-sum combine in the wrapper.
    loss_tiled = drug_target_interaction_loss(pred, interaction_score,
                                              tile_rows=8, num_shards=2)
    jax.block_until_ready(loss_tiled)
    assert jnp.allclose(loss_tiled, ref, rtol=1e-5, atol=1e-4), (loss_tiled, ref)

    # Ragged batch (B=20, 8-row tiles): exercises the row mask, the clamped
    # index map for padded tiles, and reduction='sum'.
    B2 = 20
    pred2 = jax.random.normal(k3, (B2, D), dtype=jnp.float32)
    score2 = jax.random.normal(k4, (B2, D), dtype=jnp.float32)
    ref2 = _reference(pred2, score2, reduction="sum")
    loss2 = drug_target_interaction_loss(pred2, score2, reduction="sum",
                                         tile_rows=8, num_shards=2)
    jax.block_until_ready(loss2)
    assert jnp.allclose(loss2, ref2, rtol=1e-5, atol=1e-2), (loss2, ref2)

    # bf16-in-HBM path (inputs kept narrow; kernel upcasts to f32 in VMEM).
    pred_bf = pred.astype(jnp.bfloat16)
    score_bf = interaction_score.astype(jnp.bfloat16)
    ref_bf = _reference(pred_bf, score_bf)
    loss_bf = drug_target_interaction_loss(pred_bf, score_bf, tile_rows=8)
    jax.block_until_ready(loss_bf)
    assert jnp.allclose(loss_bf, ref_bf, rtol=1e-4, atol=1e-3), (loss_bf, ref_bf)

    print("KERNEL_OK")
</pallas_src>

<mosaic_0001>
module attributes {stable_mosaic.version = 11 : i64} {
  func.func @_dti_loss_kernel(%arg0: i32, %arg1: i32, %arg2: memref<16x32xf32, #tpu.memory_space<vmem>>, %arg3: memref<16x32xf32, #tpu.memory_space<vmem>>, %arg4: memref<1x2xf32, #tpu.memory_space<smem>>, %arg5: memref<2xf32, #tpu.memory_space<smem>>) attributes {dimension_semantics = [#tpu.dimension_semantics<parallel>, #tpu.dimension_semantics<arbitrary>], iteration_bounds = array<i64: 1, 1>, scalar_prefetch = 0 : i64, scratch_operands = 1 : i64, tpu.core_type = #tpu.core_type<tc>, window_params = [{transform_indices = @transform_0, window_bounds = array<i64: 16, 32>}, {transform_indices = @transform_1, window_bounds = array<i64: 16, 32>}, {transform_indices = @transform_2, window_bounds = array<i64: 1, 2>}]} {
    %c0_i32 = arith.constant 0 : i32
    %0 = arith.cmpi eq, %arg1, %c0_i32 : i32
    %1 = arith.extui %0 : i1 to i32
    %c0_i32_0 = arith.constant 0 : i32
    %2 = arith.cmpi ne, %1, %c0_i32_0 : i32
    scf.if %2 {
      %cst_16 = arith.constant 0.000000e+00 : f32
      %c0_17 = arith.constant 0 : index
      %42 = memref.load %arg5[%c0_17] : memref<2xf32, #tpu.memory_space<smem>>
      memref.store %cst_16, %arg5[%c0_17] : memref<2xf32, #tpu.memory_space<smem>>
      %cst_18 = arith.constant 0.000000e+00 : f32
      %c1_19 = arith.constant 1 : index
      %43 = memref.load %arg5[%c1_19] : memref<2xf32, #tpu.memory_space<smem>>
      memref.store %cst_18, %arg5[%c1_19] : memref<2xf32, #tpu.memory_space<smem>>
    } else {
    }
    %c0 = arith.constant 0 : index
    %c0_1 = arith.constant 0 : index
    %3 = vector.load %arg2[%c0, %c0_1] : memref<16x32xf32, #tpu.memory_space<vmem>>, vector<16x32xf32>
    %c0_2 = arith.constant 0 : index
    %c0_3 = arith.constant 0 : index
    %4 = vector.load %arg3[%c0_2, %c0_3] : memref<16x32xf32, #tpu.memory_space<vmem>>, vector<16x32xf32>
    %5 = arith.mulf %3, %4 : vector<16x32xf32>
    %cst = arith.constant dense<0.000000e+00> : vector<16xf32>
    %6 = vector.multi_reduction <add>, %5, %cst [1] : vector<16x32xf32> to vector<16xf32>
    %7 = vector.shape_cast %6 : vector<16xf32> to vector<16x1xf32>
    %8 = arith.mulf %3, %3 : vector<16x32xf32>
    %cst_4 = arith.constant dense<0.000000e+00> : vector<16xf32>
    %9 = vector.multi_reduction <add>, %8, %cst_4 [1] : vector<16x32xf32> to vector<16xf32>
    %10 = vector.shape_cast %9 : vector<16xf32> to vector<16x1xf32>
    %11 = arith.mulf %4, %4 : vector<16x32xf32>
    %cst_5 = arith.constant dense<0.000000e+00> : vector<16xf32>
    %12 = vector.multi_reduction <add>, %11, %cst_5 [1] : vector<16x32xf32> to vector<16xf32>
    %13 = vector.shape_cast %12 : vector<16xf32> to vector<16x1xf32>
    %14 = arith.mulf %10, %13 : vector<16x1xf32>
    %cst_6 = arith.constant 1.000000e-16 : f32
    %15 = vector.broadcast %cst_6 : f32 to vector<16x1xf32>
    %16 = arith.maximumf %14, %15 : vector<16x1xf32>
    %17 = math.rsqrt %16 : vector<16x1xf32>
    %18 = arith.mulf %7, %17 : vector<16x1xf32>
    %cst_7 = arith.constant 1.000000e+00 : f32
    %19 = vector.broadcast %cst_7 : f32 to vector<16x1xf32>
    %20 = arith.subf %19, %18 : vector<16x1xf32>
    %21 = arith.addf %10, %13 : vector<16x1xf32>
    %cst_8 = arith.constant 2.000000e+00 : f32
    %22 = vector.broadcast %cst_8 : f32 to vector<16x1xf32>
    %23 = arith.mulf %22, %7 : vector<16x1xf32>
    %24 = arith.subf %21, %23 : vector<16x1xf32>
    %c0_9 = arith.constant 0 : index
    %25 = memref.load %arg5[%c0_9] : memref<2xf32, #tpu.memory_space<smem>>
    %26 = vector.shape_cast %20 : vector<16x1xf32> to vector<1x16x1xf32>
    %cst_10 = arith.constant dense<0.000000e+00> : vector<1xf32>
    %27 = vector.multi_reduction <add>, %26, %cst_10 [1, 2] : vector<1x16x1xf32> to vector<1xf32>
    %28 = vector.shape_cast %27 : vector<1xf32> to vector<1x1x1xf32>
    %29 = vector.extract %28[0, 0, 0] : f32 from vector<1x1x1xf32>
    %30 = arith.addf %25, %29 : f32
    %c0_11 = arith.constant 0 : index
    %31 = memref.load %arg5[%c0_11] : memref<2xf32, #tpu.memory_space<smem>>
    memref.store %30, %arg5[%c0_11] : memref<2xf32, #tpu.memory_space<smem>>
    %c1 = arith.constant 1 : index
    %32 = memref.load %arg5[%c1] : memref<2xf32, #tpu.memory_space<smem>>
    %33 = vector.shape_cast %24 : vector<16x1xf32> to vector<1x16x1xf32>
    %cst_12 = arith.constant dense<0.000000e+00> : vector<1xf32>
    %34 = vector.multi_reduction <add>, %33, %cst_12 [1, 2] : vector<1x16x1xf32> to vector<1xf32>
    %35 = vector.shape_cast %34 : vector<1xf32> to vector<1x1x1xf32>
    %36 = vector.extract %35[0, 0, 0] : f32 from vector<1x1x1xf32>
    %37 = arith.addf %32, %36 : f32
    %c1_13 = arith.constant 1 : index
    %38 = memref.load %arg5[%c1_13] : memref<2xf32, #tpu.memory_space<smem>>
    memref.store %37, %arg5[%c1_13] : memref<2xf32, #tpu.memory_space<smem>>
    %c0_i32_14 = arith.constant 0 : i32
    %39 = arith.cmpi eq, %arg1, %c0_i32_14 : i32
    %40 = arith.extui %39 : i1 to i32
    %c0_i32_15 = arith.constant 0 : i32
    %41 = arith.cmpi ne, %40, %c0_i32_15 : i32
    scf.if %41 {
      %c0_16 = arith.constant 0 : index
      %42 = memref.load %arg5[%c0_16] : memref<2xf32, #tpu.memory_space<smem>>
      %c0_17 = arith.constant 0 : index
      %c0_18 = arith.constant 0 : index
      %43 = memref.load %arg4[%c0_17, %c0_18] : memref<1x2xf32, #tpu.memory_space<smem>>
      memref.store %42, %arg4[%c0_17, %c0_18] : memref<1x2xf32, #tpu.memory_space<smem>>
      %c1_19 = arith.constant 1 : index
      %44 = memref.load %arg5[%c1_19] : memref<2xf32, #tpu.memory_space<smem>>
      %c0_20 = arith.constant 0 : index
      %c1_21 = arith.constant 1 : index
      %45 = memref.load %arg4[%c0_20, %c1_21] : memref<1x2xf32, #tpu.memory_space<smem>>
      memref.store %44, %arg4[%c0_20, %c1_21] : memref<1x2xf32, #tpu.memory_space<smem>>
    } else {
    }
    return
  }
  func.func @transform_0(%arg0: i32, %arg1: i32) -> (i32, i32) {
    %c1_i32 = arith.constant 1 : i32
    %0 = arith.muli %arg0, %c1_i32 : i32
    %1 = arith.addi %0, %arg1 : i32
    %c0_i32 = arith.constant 0 : i32
    %c0_i32_0 = arith.constant 0 : i32
    return %1, %c0_i32 : i32, i32
  }
  func.func @transform_1(%arg0: i32, %arg1: i32) -> (i32, i32) {
    %c1_i32 = arith.constant 1 : i32
    %0 = arith.muli %arg0, %c1_i32 : i32
    %1 = arith.addi %0, %arg1 : i32
    %c0_i32 = arith.constant 0 : i32
    %c0_i32_0 = arith.constant 0 : i32
    return %1, %c0_i32 : i32, i32
  }
  func.func @transform_2(%arg0: i32, %arg1: i32) -> (i32, i32) {
    %c0_i32 = arith.constant 0 : i32
    %c0_i32_0 = arith.constant 0 : i32
    return %arg0, %c0_i32 : i32, i32
  }
}

</mosaic_0001>

<llo_original>
// kernel: tpu_custom_call.1
$region0: #{tpu_custom_call.1}
  #allocation0 [shape = 'u32[]', space=smem, size = 0x4, offset = 0x4, fixed_abs, tag = 'smem constant byte address 0x4 - core index']
  #allocation1 [shape = 'u32[144,128]{1,0:T(1,128)}', space=vmem, size = 0x12000, scoped, tag = 'internal scratch']
  #allocation2 [shape = 'f32[2]{0:T(128)}', space=smem, size = 0x200, scoped, tag = 'scratch operand']
  %s0 = inlined_call_operand.hbm [shape: f32[16,32], index: 0, kind: input, shape index: {}]
  %s1 = inlined_call_operand.hbm [shape: f32[16,32], index: 1, kind: input, shape index: {}]
  %s2 = inlined_call_operand.hbm [shape: f32[1,2], index: 2, kind: output, shape index: {}]
  %s3 = sld [smem:[#allocation0]]
  $region34: #{tpu_custom_call.1} parent=0
    _
  %s5 = ssub.s32 1, %s3
  %s6 = scalar_select 0, %s5, %s3
  $region1: #{tpu_custom_call.1} parent=0
    #allocation3 [shape = 'u8[8192]{0}', space=vmem, size = 0x2000, scoped, tag = 'input window, operand 0, single buffered']
    #allocation4 [shape = 's32[1]{0}', space=sflag, size = 0x4, scoped, tag = 'scoped memory for tpu_custom_call.1']
    #allocation5 [shape = 's32[1]{0}', space=sflag, size = 0x4, scoped, tag = 'scoped memory for tpu_custom_call.1']
    #allocation6 [shape = 'u8[8192]{0}', space=vmem, size = 0x2000, scoped, tag = 'input window, operand 1, single buffered']
    #allocation7 [shape = 's32[1]{0}', space=sflag, size = 0x4, scoped, tag = 'scoped memory for tpu_custom_call.1']
    #allocation8 [shape = 'u8[512]{0}', space=smem, size = 0x200, scoped, tag = 'output window, operand 0, single buffered']
    %7 = vsyncpa [#allocation4], 0
    %8 = vsyncpa [#allocation7], 0
    %9 = vsyncpa [#allocation5], 0
    // Predicated region
    $region2: #{tpu_custom_call.1} parent=1 // pred_check
      _
    $region3: #{tpu_custom_call.1} parent=1 // pred_check_branch
      %11 = sbr.rel (0) target = $region5
    $region4: #{tpu_custom_call.1} parent=1 // pred_region
      %s12 = sadd.s32 0, 0
      %s13 = smul.u32 2, %s12
      %s15 = ssub.s32 256, 256
      %16 = vsyncadd [#allocation4], %s15
      %s17 = smul.addr %s13, 128
      %s18 = scalar_lea.hbm %s0, %s17
      %s19 = sshll.u32 [#allocation3], 4
      %s20 = int_to_ptr.vmem [resolvable:$true] %s19
      %25 = dma.hbm_to_vmem [thread:$0]  %s18, 256, %s20, [#allocation4], 128, 128, 8
    $region5: #{tpu_custom_call.1} parent=1 // pred_fallthru
      _
    // Predicated region
    $region6: #{tpu_custom_call.1} parent=1 // pred_check
      _
    $region7: #{tpu_custom_call.1} parent=1 // pred_check_branch
      %27 = sbr.rel (0) target = $region9
    $region8: #{tpu_custom_call.1} parent=1 // pred_region
      %s28 = sadd.s32 0, 0
      %s29 = smul.u32 2, %s28
      %s31 = ssub.s32 256, 256
      %32 = vsyncadd [#allocation7], %s31
      %s33 = smul.addr %s29, 128
      %s34 = scalar_lea.hbm %s1, %s33
      %s35 = sshll.u32 [#allocation6], 4
      %s36 = int_to_ptr.vmem [resolvable:$true] %s35
      %41 = dma.hbm_to_vmem [thread:$0]  %s34, 256, %s36, [#allocation7], 128, 128, 8
    $region9: #{tpu_custom_call.1} parent=1 // pred_fallthru
      _
    // Predicated region
    $region10: #{tpu_custom_call.1} parent=1 // pred_check
      _
    $region11: #{tpu_custom_call.1} parent=1 // pred_check_branch
      %43 = sbr.rel (0) target = $region13
    $region12: #{tpu_custom_call.1} parent=1 // pred_region
      %44 = dma.done [#allocation4], 256
    $region13: #{tpu_custom_call.1} parent=1 // pred_fallthru
      _
    // Predicated region
    $region14: #{tpu_custom_call.1} parent=1 // pred_check
      _
    $region15: #{tpu_custom_call.1} parent=1 // pred_check_branch
      %46 = sbr.rel (0) target = $region17
    $region16: #{tpu_custom_call.1} parent=1 // pred_region
      %47 = dma.done [#allocation7], 256
    $region17: #{tpu_custom_call.1} parent=1 // pred_fallthru
      _
    %s48 = sadd.s32 0, 0
    %s49 = smul.u32 2, %s48
    %s50 = sadd.s32 0, 0
    %s51 = smul.u32 2, %s50
    %p52 = scmp.eq.s32.totalorder 0, 0
    // Predicated region
    $region18: #{tpu_custom_call.1} parent=1 // pred_check
      %p53 = pneg %p52
    $region19: #{tpu_custom_call.1} parent=1 // pred_check_branch
      %55 = sbr.rel (%p53) target = $region21
    $region20: #{tpu_custom_call.1} parent=1 // pred_region
      %s56 = scalar_lea.smem [#allocation2], 0
      %57 = sst [smem:[%s56]] 0.0
      %s58 = scalar_lea.smem [#allocation2], 1
      %59 = sst [smem:[%s58]] 0.0
    $region21: #{tpu_custom_call.1} parent=1 // pred_fallthru
      _
    %v60 = vld [vmem:[#allocation3] sm:$0xff]
    %v61 = vld [vmem:[#allocation3 + $0x8] sm:$0xff]
    %v62 = vld [vmem:[#allocation6] sm:$0xff]
    %v63 = vld [vmem:[#allocation6 + $0x8] sm:$0xff]
    %v64 = vmul.f32 %v60, %v62
    %v65 = vmul.f32 %v61, %v63
    %vm66 = vcmask 261120
    %v67 = vsel %vm66, %v64, 0.0
    %68 = vadd.xlane.f32.xlu0 %v67
    %v69 = vpop.xlane.xlu0 %68
    %v70 = vsel %vm66, %v65, 0.0
    %71 = vadd.xlane.f32.xlu0 %v70
    %v72 = vpop.xlane.xlu0 %71
    %v73 = vmul.f32 %v60, %v60
    %v74 = vmul.f32 %v61, %v61
    %v75 = vsel %vm66, %v73, 0.0
    %76 = vadd.xlane.f32.xlu0 %v75
    %v77 = vpop.xlane.xlu0 %76
    %v78 = vsel %vm66, %v74, 0.0
    %79 = vadd.xlane.f32.xlu0 %v78
    %v80 = vpop.xlane.xlu0 %79
    %v81 = vmul.f32 %v62, %v62
    %v82 = vmul.f32 %v63, %v63
    %v83 = vsel %vm66, %v81, 0.0
    %84 = vadd.xlane.f32.xlu0 %v83
    %v85 = vpop.xlane.xlu0 %84
    %v86 = vsel %vm66, %v82, 0.0
    %87 = vadd.xlane.f32.xlu0 %v86
    %v88 = vpop.xlane.xlu0 %87
    %v89 = vmul.f32 %v77, %v85
    %v90 = vmul.f32 %v80, %v88
    %v91 = vmax.f32 %v89, 1e-16
    %v92 = vmax.f32 %v90, 1e-16
    %v93 = vrsqrt.pop %v91
    %v94 = vrsqrt.pop %v92
    %v95 = vmul.f32 %v69, %v93
    %v96 = vmul.f32 %v72, %v94
    %v97 = vsub.f32 1.0, %v95
    %v98 = vsub.f32 1.0, %v96
    %v99 = vadd.f32 %v77, %v85
    %v100 = vadd.f32 %v80, %v88
    %v101 = vmul.f32 %v69, 2.0
    %v102 = vmul.f32 %v72, 2.0
    %v103 = vsub.f32 %v99, %v101
    %v104 = vsub.f32 %v100, %v102
    %s105 = sld [smem:[#allocation2]]
    %vm106 = vcmask 7168
    %v107 = vsel %vm106, %v97, 0.0
    %v108 = vsel %vm106, %v98, 0.0
    %v109 = vadd.f32 %v107, %v108
    %110 = vadd.xlane.f32.xlu0 %v109
    %v111 = vpop.xlane.xlu0 %110
    %v112 = vrot.slane %v111, 4
    %v113 = vadd.f32 %v111, %v112
    %v114 = vrot.slane %v113, 2
    %v115 = vadd.f32 %v113, %v114
    %v116 = vrot.slane %v115, 1
    %v117 = vadd.f32 %v115, %v116
    %s118 = vtos %v117
    %s119 = sadd.f32 %s105, %s118
    %s120 = scalar_lea.smem [#allocation2], 0
    %121 = sst [smem:[%s120]] %s119
    %s122 = sld [smem:[#allocation2 + $0x1]]
    %v123 = vsel %vm106, %v103, 0.0
    %v124 = vsel %vm106, %v104, 0.0
    %v125 = vadd.f32 %v123, %v124
    %126 = vadd.xlane.f32.xlu0 %v125
    %v127 = vpop.xlane.xlu0 %126
    %v128 = vrot.slane %v127, 4
    %v129 = vadd.f32 %v127, %v128
    %v130 = vrot.slane %v129, 2
    %v131 = vadd.f32 %v129, %v130
    %v132 = vrot.slane %v131, 1
    %v133 = vadd.f32 %v131, %v132
    %s134 = vtos %v133
    %s135 = sadd.f32 %s122, %s134
    %s136 = scalar_lea.smem [#allocation2], 1
    %137 = sst [smem:[%s136]] %s135
    // Predicated region
    $region22: #{tpu_custom_call.1} parent=1 // pred_check
      %p138 = pneg %p52
    $region23: #{tpu_custom_call.1} parent=1 // pred_check_branch
      %140 = sbr.rel (%p138) target = $region25
    $region24: #{tpu_custom_call.1} parent=1 // pred_region
      %s141 = sld [smem:[#allocation2]]
      %s142 = scalar_lea.smem [#allocation8], 0
      %143 = sst [smem:[%s142]] %s141
      %s144 = sld [smem:[#allocation2 + $0x1]]
      %s145 = scalar_lea.smem [#allocation8], 1
      %146 = sst [smem:[%s145]] %s144
    $region25: #{tpu_custom_call.1} parent=1 // pred_fallthru
      _
    // Predicated region
    $region26: #{tpu_custom_call.1} parent=1 // pred_check
      _
    $region27: #{tpu_custom_call.1} parent=1 // pred_check_branch
      %148 = sbr.rel (0) target = $region29
    $region28: #{tpu_custom_call.1} parent=1 // pred_region
      %s150 = ssub.s32 16, 16
      %151 = vsyncadd [#allocation5], %s150
      %154 = dma.smem_to_hbm [#allocation8], 16, %s2, [#allocation5]
    $region29: #{tpu_custom_call.1} parent=1 // pred_fallthru
      _
    // Predicated region
    $region30: #{tpu_custom_call.1} parent=1 // pred_check
      _
    $region31: #{tpu_custom_call.1} parent=1 // pred_check_branch
      %156 = sbr.rel (0) target = $region33
    $region32: #{tpu_custom_call.1} parent=1 // pred_region
      %157 = dma.done [#allocation5], 16
    $region33: #{tpu_custom_call.1} parent=1 // pred_fallthru
      _
    %158 = sfence
    %159 = vsyncpa [#allocation4], 1
    %160 = vsyncpa [#allocation7], 1
    %161 = vsyncpa [#allocation5], 1

</llo_original>
